<compile_context>
chip_gen: v5e
topology: v5e:2x2
jax: 0.10.0
libtpu: 0.0.40
codegen_flags: <defaults>
</compile_context>

<pallas_src>
import math

import jax
import jax.numpy as jnp
from jax import lax
from jax.experimental import pallas as pl
from jax.experimental.pallas import tpu as pltpu


_LANES = 128
_SUBLANES = 8
# ~4 MiB output blocks: per-step HBM write time comfortably dominates the
# ~0.35 us grid-step overhead on v5e/v6e/v7x; 2x out (8 MiB) + 2x in (<4 MiB)
# stays inside v5e's 16 MiB default scoped VMEM -> no vmem_limit_bytes bump.
_OUT_BLOCK_TARGET_BYTES = 4 << 20
# Input (single-replica) feature tile cap, decoupled from the output target:
# the input is read once per (batch, feature-tile) regardless; this only
# bounds its (sublane-padded) double-buffered VMEM footprint.
_IN_TILE_TARGET_BYTES = 256 << 10
# Column chunk for the in-kernel copy: bounds the live broadcast slab to
# <= 8 vregs, so there are no spills at any block size.
_COL_CHUNK = 1024
# Above this many 8-replica groups, switch the store loop from a static
# Python unroll to lax.fori_loop(unroll=8) (keeps the program small when k is
# large and F is small).
_MAX_STATIC_GROUPS = 8


def _round_up(n, m):
    return ((n + m - 1) // m) * m


def _mc_expand_kernel(x_ref, o_ref):
    # x_ref: (1, 1, TF)  one feature tile of sample b.  Its index_map ignores
    #        the innermost replica-tile grid axis, so Pallas DMAs it only once
    #        per (b, f) pair (no re-read per replica block).
    # o_ref: (1, TK, TF) TK replicas of that tile.  Replicas are the sublane
    #        axis -> dense (8,128) VMEM tiles and lane-dense stores whenever
    #        TF is 128-aligned.
    tk = o_ref.shape[1]
    tf = o_ref.shape[2]
    n8 = tk // _SUBLANES          # full sublane-dense 8-replica groups

    # Static column loop is bounded: TK * TF is bounded by the ~4 MiB block
    # budget and TF by the input-tile cap.
    for c0 in range(0, tf, _COL_CHUNK):
        c1 = min(c0 + _COL_CHUNK, tf)
        w = c1 - c0
        row = x_ref[0, 0:1, c0:c1]                        # (1, w)
        if n8 > 0:
            # One sublane broadcast per chunk, reused for every replica group
            # (hoisted: JAX does not CSE broadcast_in_dim).
            slab = jnp.broadcast_to(row, (_SUBLANES, w))  # (8, w), dense
            if n8 <= _MAX_STATIC_GROUPS:
                for g in range(n8):
                    o_ref[0, pl.ds(g * _SUBLANES, _SUBLANES), c0:c1] = slab
            else:
                def store_group(g, carry):
                    o_ref[0,
                          pl.ds(pl.multiple_of(g * _SUBLANES, _SUBLANES),
                                _SUBLANES),
                          c0:c1] = slab
                    return carry
                lax.fori_loop(0, n8, store_group, 0,
                              unroll=_MAX_STATIC_GROUPS)
        # Tail replicas (< 8): only reached when TK == k and k % 8 != 0.
        for t in range(n8 * _SUBLANES, tk):
            o_ref[0, t:t + 1, c0:c1] = row


def bayesian_module_forward(x, k):
    """JAX/Pallas equivalent of BayesianModule.forward(input_B, k).

    deterministic_forward_impl and mc_forward_impl are identity in the base
    class, so the whole forward is the MC tiling: each input sample is
    replicated k times along a new axis 1.
    Returns shape (B, k, *x.shape[1:]) with out[b, j] == x[b].
    """
    if not isinstance(k, int):
        raise TypeError("k must be a static Python int (it sets block shapes)")
    if k <= 0:
        raise ValueError("k must be >= 1")

    B = x.shape[0]
    feat_shape = x.shape[1:]
    F = int(math.prod(feat_shape)) if feat_shape else 1
    esize = jnp.dtype(x.dtype).itemsize

    # Flatten features.  No padding and no post-slice: the kernel writes the
    # exact (B, k, F) output; unaligned / partial tiles are handled by masked
    # block writeback, so total HBM traffic is one B*F read + one B*k*F write.
    x3 = x.reshape(B, 1, F)

    # --- feature (lane) tile: full F, or a 128-multiple capped at ~256 KiB ---
    max_tf = max(_LANES, (_IN_TILE_TARGET_BYTES // esize) // _LANES * _LANES)
    tf = F if F <= max_tf else max_tf
    ft = pl.cdiv(F, tf)
    # VMEM footprint of one replica row of the block (lane-padded width).
    row_bytes_padded = _round_up(tf, _LANES) * esize

    # --- replica (sublane) tile: sized for ~4 MiB output blocks ---
    budget_rows = max(_SUBLANES, _OUT_BLOCK_TARGET_BYTES // row_bytes_padded)
    if k <= budget_rows:
        tk = k                               # single replica block (== full dim)
    else:
        tk = (budget_rows // _SUBLANES) * _SUBLANES
    # v7x megacore: if everything outside the innermost replica axis is a
    # single grid step (B == 1, one feature tile), split the replica axis so
    # both TensorCores get work.
    if B == 1 and ft == 1 and k >= 16 and tk == k:
        tk = max(_SUBLANES, ((k // 2) // _SUBLANES) * _SUBLANES)
    kt = pl.cdiv(k, tk)

    cost = pl.CostEstimate(flops=0, transcendentals=0,
                           bytes_accessed=(B * F + B * k * F) * esize)

    out = pl.pallas_call(
        _mc_expand_kernel,
        out_shape=jax.ShapeDtypeStruct((B, k, F), x.dtype),
        grid_spec=pltpu.PrefetchScalarGridSpec(
            num_scalar_prefetch=0,
            # Replica-tile axis innermost: the input block index is unchanged
            # across it, so the input is DMA'd only once per (b, f) pair.
            grid=(B, ft, kt),
            in_specs=[pl.BlockSpec((1, 1, tf), lambda b, f, j: (b, 0, f))],
            out_specs=pl.BlockSpec((1, tk, tf), lambda b, f, j: (b, j, f)),
        ),
        compiler_params=pltpu.CompilerParams(
            # Every grid point writes a disjoint output block -> fully
            # parallel; lets v7x split work across its 2 TensorCores.
            dimension_semantics=("parallel", "parallel", "parallel")),
        cost_estimate=cost,
    )(x3)

    return out.reshape((B, k) + feat_shape)


# TODO(synk): _MCDropout (Bernoulli masking / scaling) is a dependent class but
# is never invoked by the base BayesianModule.forward (mc_forward_impl is
# identity), so it is intentionally not part of this kernel.


if __name__ == "__main__":
    key = jax.random.PRNGKey(0)

    # Main case: NCHW input, 128-aligned flattened feature size.
    B, C, H, W = 2, 4, 16, 16
    K = 8  # number of MC samples
    x = jax.random.normal(key, (B, C, H, W), dtype=jnp.float32)
    out = jax.block_until_ready(bayesian_module_forward(x, K))
    ref = jnp.broadcast_to(x[:, None], (B, K, C, H, W))
    assert out.shape == (B, K, C, H, W), out.shape
    assert bool(jnp.array_equal(out, ref))

    # Non-128-aligned feature size with k < 8: single-row tail-store path,
    # masked lane writes, no pad / slice passes around the kernel.
    x2 = jax.random.normal(jax.random.PRNGKey(1), (2, 3, 5, 7), dtype=jnp.float32)
    K2 = 3
    out2 = jax.block_until_ready(bayesian_module_forward(x2, K2))
    ref2 = jnp.broadcast_to(x2[:, None], (2, K2, 3, 5, 7))
    assert out2.shape == (2, K2, 3, 5, 7), out2.shape
    assert bool(jnp.array_equal(out2, ref2))

    # B == 1 with k not a multiple of the replica tile: exercises the v7x
    # replica split (kt > 1) and the cdiv / masked-writeback partial block.
    x3 = jax.random.normal(jax.random.PRNGKey(2), (1, 4, 8, 8), dtype=jnp.float32)
    K3 = 20
    out3 = jax.block_until_ready(bayesian_module_forward(x3, K3))
    ref3 = jnp.broadcast_to(x3[:, None], (1, K3, 4, 8, 8))
    assert out3.shape == (1, K3, 4, 8, 8), out3.shape
    assert bool(jnp.array_equal(out3, ref3))

    print("KERNEL_OK")
</pallas_src>

<mosaic_0001>
module attributes {stable_mosaic.version = 11 : i64} {
  func.func @_mc_expand_kernel(%arg0: i32, %arg1: i32, %arg2: i32, %arg3: memref<1x1x1024xf32, #tpu.memory_space<vmem>>, %arg4: memref<1x8x1024xf32, #tpu.memory_space<vmem>>) attributes {dimension_semantics = [#tpu.dimension_semantics<parallel>, #tpu.dimension_semantics<parallel>, #tpu.dimension_semantics<parallel>], iteration_bounds = array<i64: 2, 1, 1>, scalar_prefetch = 0 : i64, scratch_operands = 0 : i64, tpu.core_type = #tpu.core_type<tc>, window_params = [{transform_indices = @transform_0, window_bounds = array<i64: 1, 1, 1024>}, {transform_indices = @transform_1, window_bounds = array<i64: 1, 8, 1024>}]} {
    %c0 = arith.constant 0 : index
    %c0_0 = arith.constant 0 : index
    %c0_1 = arith.constant 0 : index
    %0 = vector.load %arg3[%c0, %c0_0, %c0_1] : memref<1x1x1024xf32, #tpu.memory_space<vmem>>, vector<1x1x1024xf32>
    %1 = vector.shape_cast %0 : vector<1x1x1024xf32> to vector<1x1024xf32>
    %2 = vector.shape_cast %1 : vector<1x1024xf32> to vector<1x1024xf32>
    %3 = vector.broadcast %2 : vector<1x1024xf32> to vector<8x1024xf32>
    %c0_2 = arith.constant 0 : index
    %c0_3 = arith.constant 0 : index
    %c0_4 = arith.constant 0 : index
    %4 = vector.load %arg4[%c0_2, %c0_3, %c0_4] : memref<1x8x1024xf32, #tpu.memory_space<vmem>>, vector<1x8x1024xf32>
    %5 = vector.shape_cast %4 : vector<1x8x1024xf32> to vector<8x1024xf32>
    %6 = vector.shape_cast %3 : vector<8x1024xf32> to vector<1x8x1024xf32>
    tpu.vector_store %arg4[%c0_2, %c0_3, %c0_4], %6 {strides = array<i32>} : memref<1x8x1024xf32, #tpu.memory_space<vmem>>, vector<1x8x1024xf32>,
    return
  }
  func.func @transform_0(%arg0: i32, %arg1: i32, %arg2: i32) -> (i32, i32, i32) {
    %c0_i32 = arith.constant 0 : i32
    %c0_i32_0 = arith.constant 0 : i32
    return %arg0, %c0_i32, %arg1 : i32, i32, i32
  }
  func.func @transform_1(%arg0: i32, %arg1: i32, %arg2: i32) -> (i32, i32, i32) {
    %c0_i32 = arith.constant 0 : i32
    return %arg0, %arg2, %arg1 : i32, i32, i32
  }
}

</mosaic_0001>

<llo_original>
// kernel: tpu_custom_call.1
$region0: #{tpu_custom_call.1}
  #allocation0 [shape = 'u32[]', space=smem, size = 0x4, offset = 0x4, fixed_abs, tag = 'smem constant byte address 0x4 - core index']
  #allocation1 [shape = 'u32[72,128]{1,0:T(1,128)}', space=vmem, size = 0x9000, scoped, tag = 'internal scratch']
  %s0 = inlined_call_operand.hbm [shape: f32[2,1,1024], index: 0, kind: input, shape index: {}]
  %s1 = inlined_call_operand.hbm [shape: f32[2,8,1024], index: 1, kind: output, shape index: {}]
  %s2 = sld [smem:[#allocation0]]
  $region41: #{tpu_custom_call.1} parent=0
    _
  %s4 = ssub.s32 1, %s2
  %s5 = scalar_select 0, %s4, %s2
  $region1: #{tpu_custom_call.1} parent=0
    #allocation2 [shape = 'u8[8192]{0}', space=vmem, size = 0x2000, scoped, tag = 'input window, operand 0']
    #allocation3 [shape = 's32[2]{0}', space=sflag, size = 0x8, scoped, tag = 'scoped memory for tpu_custom_call.1']
    #allocation4 [shape = 's32[2]{0}', space=sflag, size = 0x8, scoped, tag = 'scoped memory for tpu_custom_call.1']
    #allocation5 [shape = 'u8[65536]{0}', space=vmem, size = 0x10000, scoped, tag = 'output window, operand 0']
    %6 = vsyncpa [#allocation3], 0
    %s7 = scalar_lea.sflag [#allocation3], 1
    %8 = vsyncpa %s7, 0
    %9 = vsyncpa [#allocation4], 0
    %s10 = scalar_lea.sflag [#allocation4], 1
    %11 = vsyncpa %s10, 0
    loop: start=0, step=1, limit=4
    $region2: #{tpu_custom_call.1} parent=1 // loop_pre_header
      _
    $region3: #{tpu_custom_call.1} parent=1 // loop_header
      %s13 = sphi 0, %s17
      %p14 = scmp.ge.s32.totalorder %s13, 4
      %s20 = sphi 0, %s39
      %s21 = sphi 0, %s35
      %s22 = sphi 0, %s31
      %s23 = sphi 0, %s20
      %s24 = sphi 0, %s21
      %s25 = sphi 0, %s22
      %s26 = sphi 0, %s23
      %s27 = sphi 0, %s24
      %s28 = sphi 0, %s25
      %s44 = sphi 0, %s46
      %s47 = sphi 0, %s44
      %s48 = sphi 0, %s47
      %s64 = sphi 0, %s48
      %s74 = sphi 0, %s76
      %s77 = sphi 0, %s74
      %s78 = sphi 0, %s77
      %s94 = sphi 0, %s78
    $region4: #{tpu_custom_call.1} parent=1 // loop_header_branch
      %16 = sbr.rel (%p14) target = $region8
    $region5: #{tpu_custom_call.1} parent=1 // loop_body
      %s18 = ssub.s32 %s13, 1
      %s19 = ssub.s32 %s13, 2
      %s29 = sadd.s32 1, %s22
      %p30 = scmp.ge.s32.totalorder %s29, 1
      %s31 = scalar_select %p30, 0, %s29
      %s32 = sadd.s32 1, %s21
      %s33 = scalar_select %p30, %s32, %s21
      %p34 = scmp.ge.s32.totalorder %s33, 1
      %s35 = scalar_select %p34, 0, %s33
      %s36 = sadd.s32 1, %s20
      %s37 = scalar_select %p34, %s36, %s20
      %p38 = scmp.ge.s32.totalorder %s37, 2
      %s39 = scalar_select %p38, 0, %s37
      %s40 = ssub.s32 %s20, %s39
      %s41 = ssub.s32 %s21, %s35
      %s42 = sor.u32 %s40, %s41
      %p43 = scmp.eq.s32.totalorder %s42, 0
      %s45 = sadd.s32 %s44, 1
      %s46 = scalar_select %p43, %s44, %s45
      %p49 = pneg %p43
      %p50 = scmp.eq.s32.totalorder %s13, 1
      %p51 = por %p49, %p50
      %p52 = scmp.ne.s32.totalorder %s44, %s47
      %p53 = scmp.eq.s32.totalorder %s13, 0
      %p54 = por %p52, %p53
      %p55 = scmp.ne.s32.totalorder %s44, %s47
      %p56 = scmp.eq.s32.totalorder %s18, 1
      %p57 = por %p55, %p56
      %p58 = scmp.ne.s32.totalorder %s47, %s48
      %p59 = scmp.eq.s32.totalorder %s18, 0
      %p60 = por %p58, %p59
      %p61 = scmp.ne.s32.totalorder %s47, %s48
      %p62 = scmp.eq.s32.totalorder %s19, 1
      %p63 = por %p61, %p62
      %p65 = scmp.ne.s32.totalorder %s48, %s64
      %p66 = scmp.eq.s32.totalorder %s19, 0
      %p67 = por %p65, %p66
      %s68 = ssub.s32 %s20, %s39
      %s69 = ssub.s32 %s22, %s31
      %s70 = sor.u32 %s68, %s69
      %s71 = ssub.s32 %s21, %s35
      %s72 = sor.u32 %s70, %s71
      %p73 = scmp.eq.s32.totalorder %s72, 0
      %s75 = sadd.s32 %s74, 1
      %s76 = scalar_select %p73, %s74, %s75
      %p79 = pneg %p73
      %p80 = scmp.eq.s32.totalorder %s13, 1
      %p81 = por %p79, %p80
      %p82 = scmp.ne.s32.totalorder %s74, %s77
      %p83 = scmp.eq.s32.totalorder %s13, 0
      %p84 = por %p82, %p83
      %p85 = scmp.ne.s32.totalorder %s74, %s77
      %p86 = scmp.eq.s32.totalorder %s18, 1
      %p87 = por %p85, %p86
      %p88 = scmp.ne.s32.totalorder %s77, %s78
      %p89 = scmp.eq.s32.totalorder %s18, 0
      %p90 = por %p88, %p89
      %p91 = scmp.ne.s32.totalorder %s77, %s78
      %p92 = scmp.eq.s32.totalorder %s19, 1
      %p93 = por %p91, %p92
      %p95 = scmp.ne.s32.totalorder %s78, %s94
      %p96 = scmp.eq.s32.totalorder %s19, 0
      %p97 = por %p95, %p96
      %p98 = scmp.le.s32.totalorder 1, %s13
      %p99 = scmp.lt.s32.totalorder %s13, 3
      %p100 = pnand %p98, %p99
      %p101 = pneg %p100
      // Predicated region
      $region9: #{tpu_custom_call.1} parent=5 // pred_check
        _
      $region10: #{tpu_custom_call.1} parent=5 // pred_check_branch
        %103 = sbr.rel (%p100) target = $region12
      $region11: #{tpu_custom_call.1} parent=5 // pred_region
        %s104 = ssub.s32 %s13, 1
      $region12: #{tpu_custom_call.1} parent=5 // pred_fallthru
        _
      %p105 = scmp.lt.s32.totalorder %s13, 2
      // Predicated region
      $region13: #{tpu_custom_call.1} parent=5 // pred_check
        %p106 = pneg %p105
      $region14: #{tpu_custom_call.1} parent=5 // pred_check_branch
        %108 = sbr.rel (%p106) target = $region16
      $region15: #{tpu_custom_call.1} parent=5 // pred_region
        // Predicated region
        $region17: #{tpu_custom_call.1} parent=15 // pred_check
          %p109 = pneg %p54
        $region18: #{tpu_custom_call.1} parent=15 // pred_check_branch
          %111 = sbr.rel (%p109) target = $region20
        $region19: #{tpu_custom_call.1} parent=15 // pred_region
          %s112 = sand.u32 %s44, 1
          %s113 = scalar_lea.sflag [#allocation3], %s112
          %s114 = sand.u32 %s44, 1
          %s115 = smul.addr %s114, 8
          %s116 = scalar_lea.vmem [#allocation2], %s115
          %s117 = smul.u32 8, %s21
          %119 = vsyncadd %s113, 0
          %s120 = smul.addr %s20, 8
          %s121 = sadd.s32 %s117, %s120
          %s122 = scalar_lea.hbm %s0, %s121
          %s124 = sshll.u32 %s122, 4
          %s125 = int_to_ptr.hbm [resolvable:$true] %s124
          %s126 = sshll.u32 %s116, 4
          %s127 = int_to_ptr.vmem [resolvable:$true] %s126
          %129 = dma.hbm_to_vmem [thread:$0]  %s125, 128, %s127, %s113
        $region20: #{tpu_custom_call.1} parent=15 // pred_fallthru
          _
      $region16: #{tpu_custom_call.1} parent=5 // pred_fallthru
        _
      %p130 = scmp.le.s32.totalorder 1, %s13
      %p131 = scmp.lt.s32.totalorder %s13, 3
      %p132 = pnand %p130, %p131
      %p133 = pneg %p132
      // Predicated region
      $region21: #{tpu_custom_call.1} parent=5 // pred_check
        _
      $region22: #{tpu_custom_call.1} parent=5 // pred_check_branch
        %135 = sbr.rel (%p132) target = $region24
      $region23: #{tpu_custom_call.1} parent=5 // pred_region
        %s136 = ssub.s32 %s13, 1
        %s137 = sand.u32 %s47, 1
        %s138 = scalar_lea.sflag [#allocation3], %s137
        %s139 = sand.u32 %s47, 1
        %s140 = smul.addr %s139, 8
        %s141 = scalar_lea.vmem [#allocation2], %s140
        // Predicated region
        $region25: #{tpu_custom_call.1} parent=23 // pred_check
          %p142 = pneg %p60
        $region26: #{tpu_custom_call.1} parent=23 // pred_check_branch
          %144 = sbr.rel (%p142) target = $region28
        $region27: #{tpu_custom_call.1} parent=23 // pred_region
          %146 = dma.done %s138, 128
        $region28: #{tpu_custom_call.1} parent=23 // pred_fallthru
          _
        %s147 = sand.u32 %s47, 1
        %s148 = scalar_lea.sflag [#allocation3], %s147
        %s149 = sand.u32 %s47, 1
        %s150 = smul.addr %s149, 8
        %s151 = scalar_lea.vmem [#allocation2], %s150
        %p152 = pneg %p60
        %p153 = pneg %p57
        %p154 = pneg %p90
        %p155 = pneg %p87
        %s156 = sand.u32 %s77, 1
        %s157 = scalar_lea.sflag [#allocation4], %s156
        %s158 = sand.u32 %s77, 1
        %s159 = smul.addr %s158, 64
        %s160 = scalar_lea.vmem [#allocation5], %s159
        %s161 = smul.u32 8, %s24
        %s162 = smul.u32 8, %s24
        %v163 = vld [vmem:[%s141] sm:$0xff]
        %v165 = vperm.slane %v163, 0
        %v166 = vperm.slane %v163, 1
        %v167 = vperm.slane %v163, 2
        %v168 = vperm.slane %v163, 3
        %v169 = vperm.slane %v163, 4
        %v170 = vperm.slane %v163, 5
        %v171 = vperm.slane %v163, 6
        %v172 = vperm.slane %v163, 7
        %181 = vst [vmem:[%s160] sm:$0xff] %v165
        %182 = vst [vmem:[%s160 + $0x8] sm:$0xff] %v166
        %183 = vst [vmem:[%s160 + $0x10] sm:$0xff] %v167
        %184 = vst [vmem:[%s160 + $0x18] sm:$0xff] %v168
        %185 = vst [vmem:[%s160 + $0x20] sm:$0xff] %v169
        %186 = vst [vmem:[%s160 + $0x28] sm:$0xff] %v170
        %187 = vst [vmem:[%s160 + $0x30] sm:$0xff] %v171
        %188 = vst [vmem:[%s160 + $0x38] sm:$0xff] %v172
        %s189 = sand.u32 %s77, 1
        %s190 = scalar_lea.sflag [#allocation4], %s189
        %s191 = sand.u32 %s77, 1
        %s192 = smul.addr %s191, 64
        %s193 = scalar_lea.vmem [#allocation5], %s192
        // Predicated region
        $region29: #{tpu_custom_call.1} parent=23 // pred_check
          %p194 = pneg %p87
        $region30: #{tpu_custom_call.1} parent=23 // pred_check_branch
          %196 = sbr.rel (%p194) target = $region32
        $region31: #{tpu_custom_call.1} parent=23 // pred_region
          %s197 = smul.u32 8, %s24
          %199 = vsyncadd %s190, 0
          %s200 = smul.addr %s25, 8
          %s201 = sadd.s32 %s197, %s200
          %s202 = smul.addr %s23, 8
          %s203 = sadd.s32 %s201, %s202
          %s204 = smul.addr %s203, 8
          %s205 = scalar_lea.hbm %s1, %s204
          %s207 = sshll.u32 %s193, 4
          %s208 = int_to_ptr.vmem [resolvable:$true] %s207
          %s209 = sshll.u32 %s205, 4
          %s210 = int_to_ptr.hbm [resolvable:$true] %s209
          %212 = dma.vmem_to_hbm [thread:$0]  %s208, 1024, %s210, %s190
        $region32: #{tpu_custom_call.1} parent=23 // pred_fallthru
          _
      $region24: #{tpu_custom_call.1} parent=5 // pred_fallthru
        _
      %p213 = scmp.le.s32.totalorder 2, %s13
      // Predicated region
      $region33: #{tpu_custom_call.1} parent=5 // pred_check
        %p214 = pneg %p213
      $region34: #{tpu_custom_call.1} parent=5 // pred_check_branch
        %216 = sbr.rel (%p214) target = $region36
      $region35: #{tpu_custom_call.1} parent=5 // pred_region
        %s217 = ssub.s32 %s13, 2
        // Predicated region
        $region37: #{tpu_custom_call.1} parent=35 // pred_check
          %p218 = pneg %p93
        $region38: #{tpu_custom_call.1} parent=35 // pred_check_branch
          %220 = sbr.rel (%p218) target = $region40
        $region39: #{tpu_custom_call.1} parent=35 // pred_region
          %s221 = sand.u32 %s78, 1
          %s222 = scalar_lea.sflag [#allocation4], %s221
          %s223 = sand.u32 %s78, 1
          %s224 = smul.addr %s223, 64
          %s225 = scalar_lea.vmem [#allocation5], %s224
          %227 = dma.done %s222, 1024
        $region40: #{tpu_custom_call.1} parent=35 // pred_fallthru
          _
      $region36: #{tpu_custom_call.1} parent=5 // pred_fallthru
        _
    $region6: #{tpu_custom_call.1} parent=1 // loop_footer
      %s17 = sadd.s32 1, %s13
    $region7: #{tpu_custom_call.1} parent=1 // loop_footer_branch
      %12 = sbr.rel target = $region3
    $region8: #{tpu_custom_call.1} parent=1 // loop_exit
      _
    %228 = vsyncpa [#allocation3], 1
    %s229 = scalar_lea.sflag [#allocation3], 1
    %230 = vsyncpa %s229, 1
    %231 = vsyncpa [#allocation4], 1
    %s232 = scalar_lea.sflag [#allocation4], 1
    %233 = vsyncpa %s232, 1

</llo_original>
